<compile_context>
chip_gen: v6e
topology: v6e:2x2x1
jax: 0.10.0
libtpu: 0.0.40
codegen_flags: <defaults>
</compile_context>

<pallas_src>
import functools

import jax
import jax.numpy as jnp
from jax.experimental import pallas as pl
from jax.experimental.pallas import tpu as pltpu

_LANE = 128


def _round_up(x, m):
    return ((x + m - 1) // m) * m


def _classification_head_kernel(x_ref, w1_ref, b1_ref, w2_ref, b2_ref, o_ref, *,
                                bf16_epilogue):
    # In-kernel activation cast: free filler under the MXU-bound dense matmul.
    x = x_ref[...].astype(w1_ref.dtype)
    # dense: (TB, H) @ (H, H) with f32 MXU accumulation.
    h = jnp.dot(x, w1_ref[...], preferred_element_type=jnp.float32)
    if bf16_epilogue:
        # v6e/v7x: VPU/EUP have bf16 -> halve the (TB, H) intermediate's VMEM traffic.
        h = jnp.tanh(h.astype(jnp.bfloat16) + b1_ref[...].astype(jnp.bfloat16))
    else:
        # v5e: no bf16 VPU/EUP -> keep the bias-add + tanh epilogue in f32.
        h = jnp.tanh(h + b1_ref[...])
    # out_proj: (TB, H) @ (H, Lpad) with f32 accumulation; bias-add in f32.
    out = jnp.dot(h.astype(w2_ref.dtype), w2_ref[...],
                  preferred_element_type=jnp.float32)
    o_ref[...] = (out + b2_ref[...]).astype(o_ref.dtype)


def prepare_classification_head_weights(w_dense, b_dense, w_out, b_out, *,
                                         param_dtype=jnp.bfloat16):
    """One-time weight prep. Call at weight-load time, NOT per forward.

    Inputs are (in_features, out_features), i.e. the PyTorch Linear .weight transposed.
    Casts matmul weights to `param_dtype` (bf16 = native MXU dtype), pads num_labels up
    to a full 128-lane width so output stores are unmasked / lane-dense, and reshapes
    the biases to 2-D broadcast rows (kept in f32).
    """
    H = w_dense.shape[0]
    L = w_out.shape[1]
    l_pad = _round_up(L, _LANE)

    w1 = w_dense.astype(param_dtype)
    w2 = w_out.astype(param_dtype)
    b1 = b_dense.astype(jnp.float32).reshape(1, H)
    b2 = b_out.astype(jnp.float32)
    if l_pad != L:
        w2 = jnp.pad(w2, ((0, 0), (0, l_pad - L)))
        b2 = jnp.pad(b2, (0, l_pad - L))
    b2 = b2.reshape(1, l_pad)
    return {"w1": w1, "b1": b1, "w2": w2, "b2": b2, "num_labels": L}


def roberta_classification_head(x, params, *, tb=512):
    """x: (B, H) activations; params from prepare_classification_head_weights.

    Returns (B, num_labels) logits in x.dtype.
    """
    w1, b1, w2, b2 = params["w1"], params["b1"], params["w2"], params["b2"]
    L = params["num_labels"]
    B, H = x.shape
    l_pad = w2.shape[1]

    kind = ""
    try:
        kind = jax.devices()[0].device_kind.lower()
    except Exception:
        pass
    is_v7x = "v7" in kind
    bf16_epilogue = ("v6" in kind) or is_v7x  # v5e VPU/EUP have no bf16 -> f32 path

    # Batch tile: multiple of 16 sublanes (dense layout for bf16 and f32 alike).
    # On v7x keep >=2 grid steps so the "parallel" axis shards across both TCs.
    if is_v7x and B > 16:
        tb = min(tb, _round_up(pl.cdiv(B, 2), 16))
    tb = max(16, min(tb, _round_up(B, 16)))
    if tb >= B:
        tb = B           # single full-extent block (no sublane-multiple requirement)
        grid_b = 1
    else:
        grid_b = pl.cdiv(B, tb)  # partial trailing block handled by Pallas masking

    # Rough resident-VMEM estimate; only raise the scoped limit when the smallest
    # default (16 MiB on v5e) would not fit. For very large hidden sizes (H >= ~3k)
    # a K-tiled variant (grid over H + f32 accumulator scratch) would be needed
    # instead of one resident (H, H) weight block.
    itemsize_x = jnp.dtype(x.dtype).itemsize
    w_bytes = (w1.size * w1.dtype.itemsize + w2.size * w2.dtype.itemsize
               + (b1.size + b2.size) * 4)
    est = (w_bytes                              # single-buffered resident weights
           + 2 * tb * H * itemsize_x            # double-buffered x tiles
           + 2 * tb * l_pad * itemsize_x        # double-buffered output tiles
           + 6 * tb * H)                        # matmul / epilogue intermediates
    vmem_limit = (min(int(est * 1.25), 64 * 1024 * 1024)
                  if est > 12 * 1024 * 1024 else None)

    kernel = functools.partial(_classification_head_kernel,
                               bf16_epilogue=bf16_epilogue)

    def _call(single_buffer_weights):
        # Constant index_map => weights/biases stay VMEM-resident; single-buffering
        # them halves their VMEM footprint (matters most on v7x's 64 MiB VMEM).
        w_kw = {"pipeline_mode": pl.Buffered(1)} if single_buffer_weights else {}
        return pl.pallas_call(
            kernel,
            out_shape=jax.ShapeDtypeStruct((B, l_pad), x.dtype),
            grid=(grid_b,),
            in_specs=[
                pl.BlockSpec((tb, H), lambda i: (i, 0)),             # x: streamed over B
                pl.BlockSpec((H, H), lambda i: (0, 0), **w_kw),      # dense weight
                pl.BlockSpec((1, H), lambda i: (0, 0), **w_kw),      # dense bias
                pl.BlockSpec((H, l_pad), lambda i: (0, 0), **w_kw),  # out_proj weight
                pl.BlockSpec((1, l_pad), lambda i: (0, 0), **w_kw),  # out_proj bias
            ],
            out_specs=pl.BlockSpec((tb, l_pad), lambda i: (i, 0)),
            compiler_params=pltpu.CompilerParams(
                dimension_semantics=("parallel",),
                vmem_limit_bytes=vmem_limit,
            ),
        )(x, w1, b1, w2, b2)

    try:
        out = _call(True)    # single-buffered resident weights
    except Exception:
        out = _call(False)   # fallback for JAX versions without pipeline_mode support

    return out[:, :L]


if __name__ == "__main__":
    # Small synthetic config: hidden_size=32, num_labels=4, batch=2.
    batch, hidden, num_labels = 2, 32, 4

    key = jax.random.PRNGKey(0)
    k_x, k_w1, k_b1, k_w2, k_b2 = jax.random.split(key, 5)

    x = jax.random.normal(k_x, (batch, hidden), dtype=jnp.float32)
    # Deterministic synthetic parameters, stored as (in_features, out_features),
    # i.e. the PyTorch Linear weight transposed.
    w_dense = jax.random.normal(k_w1, (hidden, hidden), dtype=jnp.float32) * 0.02
    b_dense = jax.random.normal(k_b1, (hidden,), dtype=jnp.float32) * 0.02
    w_out = jax.random.normal(k_w2, (hidden, num_labels), dtype=jnp.float32) * 0.02
    b_out = jax.random.normal(k_b2, (num_labels,), dtype=jnp.float32) * 0.02

    # One-time weight prep (load time), then the per-call kernel.
    params = prepare_classification_head_weights(w_dense, b_dense, w_out, b_out)
    out = roberta_classification_head(x, params)
    out = jax.block_until_ready(out)

    # Reference check in plain JAX (f32). Kernel matmuls run in bf16 with f32
    # accumulation, so use a correspondingly loose tolerance.
    ref = jnp.tanh(x @ w_dense + b_dense) @ w_out + b_out
    assert out.shape == (batch, num_labels)
    assert jnp.allclose(out, ref, atol=5e-3, rtol=5e-2), (
        f"max abs err {jnp.max(jnp.abs(out - ref))}")

    print("KERNEL_OK")
</pallas_src>

<mosaic_0001>
module attributes {stable_mosaic.version = 11 : i64} {
  func.func @_classification_head_kernel(%arg0: i32, %arg1: memref<2x32xf32, #tpu.memory_space<vmem>>, %arg2: memref<32x32xbf16, #tpu.memory_space<vmem>>, %arg3: memref<1x32xf32, #tpu.memory_space<vmem>>, %arg4: memref<32x128xbf16, #tpu.memory_space<vmem>>, %arg5: memref<1x128xf32, #tpu.memory_space<vmem>>, %arg6: memref<2x128xf32, #tpu.memory_space<vmem>>) attributes {dimension_semantics = [#tpu.dimension_semantics<parallel>], iteration_bounds = array<i64: 1>, scalar_prefetch = 0 : i64, scratch_operands = 0 : i64, tpu.core_type = #tpu.core_type<tc>, window_params = [{transform_indices = @transform_0, window_bounds = array<i64: 2, 32>}, {pipeline_mode = #tpu.pipeline_mode<synchronous>, transform_indices = @transform_1, window_bounds = array<i64: 32, 32>}, {pipeline_mode = #tpu.pipeline_mode<synchronous>, transform_indices = @transform_2, window_bounds = array<i64: 1, 32>}, {pipeline_mode = #tpu.pipeline_mode<synchronous>, transform_indices = @transform_3, window_bounds = array<i64: 32, 128>}, {pipeline_mode = #tpu.pipeline_mode<synchronous>, transform_indices = @transform_4, window_bounds = array<i64: 1, 128>}, {transform_indices = @transform_5, window_bounds = array<i64: 2, 128>}]} {
    %c0 = arith.constant 0 : index
    %c0_0 = arith.constant 0 : index
    %0 = vector.load %arg1[%c0, %c0_0] : memref<2x32xf32, #tpu.memory_space<vmem>>, vector<2x32xf32>
    %1 = arith.truncf %0 : vector<2x32xf32> to vector<2x32xbf16>
    %c0_1 = arith.constant 0 : index
    %c0_2 = arith.constant 0 : index
    %2 = vector.load %arg2[%c0_1, %c0_2] : memref<32x32xbf16, #tpu.memory_space<vmem>>, vector<32x32xbf16>
    %cst = arith.constant dense<0.000000e+00> : vector<2x32xf32>
    %3 = tpu.matmul %1, %2, %cst {dimension_numbers = #tpu.dot_dimension_numbers<[1], [0], [0], [1], [0, 0, 1, 1], [], []>} : vector<2x32xbf16>, vector<32x32xbf16>, vector<2x32xf32> -> vector<2x32xf32>
    %c0_3 = arith.constant 0 : index
    %c0_4 = arith.constant 0 : index
    %4 = vector.load %arg3[%c0_3, %c0_4] : memref<1x32xf32, #tpu.memory_space<vmem>>, vector<1x32xf32>
    %5 = vector.broadcast %4 : vector<1x32xf32> to vector<2x32xf32>
    %6 = arith.addf %3, %5 : vector<2x32xf32>
    %7 = math.tanh %6 : vector<2x32xf32>
    %8 = arith.truncf %7 : vector<2x32xf32> to vector<2x32xbf16>
    %c0_5 = arith.constant 0 : index
    %c0_6 = arith.constant 0 : index
    %9 = vector.load %arg4[%c0_5, %c0_6] : memref<32x128xbf16, #tpu.memory_space<vmem>>, vector<32x128xbf16>
    %cst_7 = arith.constant dense<0.000000e+00> : vector<2x128xf32>
    %10 = tpu.matmul %8, %9, %cst_7 {dimension_numbers = #tpu.dot_dimension_numbers<[1], [0], [0], [1], [0, 0, 1, 1], [], []>} : vector<2x32xbf16>, vector<32x128xbf16>, vector<2x128xf32> -> vector<2x128xf32>
    %c0_8 = arith.constant 0 : index
    %c0_9 = arith.constant 0 : index
    %11 = vector.load %arg5[%c0_8, %c0_9] : memref<1x128xf32, #tpu.memory_space<vmem>>, vector<1x128xf32>
    %12 = vector.broadcast %11 : vector<1x128xf32> to vector<2x128xf32>
    %13 = arith.addf %10, %12 : vector<2x128xf32>
    %c0_10 = arith.constant 0 : index
    %c0_11 = arith.constant 0 : index
    %14 = vector.load %arg6[%c0_10, %c0_11] : memref<2x128xf32, #tpu.memory_space<vmem>>, vector<2x128xf32>
    tpu.vector_store %arg6[%c0_10, %c0_11], %13 {strides = array<i32>} : memref<2x128xf32, #tpu.memory_space<vmem>>, vector<2x128xf32>,
    return
  }
  func.func @transform_0(%arg0: i32) -> (i32, i32) {
    %c0_i32 = arith.constant 0 : i32
    %c0_i32_0 = arith.constant 0 : i32
    return %arg0, %c0_i32 : i32, i32
  }
  func.func @transform_1(%arg0: i32) -> (i32, i32) {
    %c0_i32 = arith.constant 0 : i32
    %c0_i32_0 = arith.constant 0 : i32
    %c0_i32_1 = arith.constant 0 : i32
    return %c0_i32, %c0_i32_0 : i32, i32
  }
  func.func @transform_2(%arg0: i32) -> (i32, i32) {
    %c0_i32 = arith.constant 0 : i32
    %c0_i32_0 = arith.constant 0 : i32
    %c0_i32_1 = arith.constant 0 : i32
    return %c0_i32, %c0_i32_0 : i32, i32
  }
  func.func @transform_3(%arg0: i32) -> (i32, i32) {
    %c0_i32 = arith.constant 0 : i32
    %c0_i32_0 = arith.constant 0 : i32
    %c0_i32_1 = arith.constant 0 : i32
    return %c0_i32, %c0_i32_0 : i32, i32
  }
  func.func @transform_4(%arg0: i32) -> (i32, i32) {
    %c0_i32 = arith.constant 0 : i32
    %c0_i32_0 = arith.constant 0 : i32
    %c0_i32_1 = arith.constant 0 : i32
    return %c0_i32, %c0_i32_0 : i32, i32
  }
  func.func @transform_5(%arg0: i32) -> (i32, i32) {
    %c0_i32 = arith.constant 0 : i32
    %c0_i32_0 = arith.constant 0 : i32
    return %arg0, %c0_i32 : i32, i32
  }
}

module attributes {stable_mosaic.version = 11 : i64} {
  func.func @_classification_head_kernel(%arg0: i32, %arg1: memref<2x32xf32, #tpu.memory_space<vmem>>, %arg2: memref<32x32xbf16, #tpu.memory_space<vmem>>, %arg3: memref<1x32xf32, #tpu.memory_space<vmem>>, %arg4: memref<32x128xbf16, #tpu.memory_space<vmem>>, %arg5: memref<1x128xf32, #tpu.memory_space<vmem>>, %arg6: memref<2x128xf32, #tpu.memory_space<vmem>>) attributes {dimension_semantics = [#tpu.dimension_semantics<parallel>], iteration_bounds = array<i64: 1>, scalar_prefetch = 0 : i64, scratch_operands = 0 : i64, tpu.core_type = #tpu.core_type<tc>, window_params = [{transform_indices = @transform_0, window_bounds = array<i64: 2, 32>}, {pipeline_mode = #tpu.pipeline_mode<synchronous>, transform_indices = @transform_1, window_bounds = array<i64: 32, 32>}, {pipeline_mode = #tpu.pipeline_mode<synchronous>, transform_indices = @transform_2, window_bounds = array<i64: 1, 32>}, {pipeline_mode = #tpu.pipeline_mode<synchronous>, transform_indices = @transform_3, window_bounds = array<i64: 32, 128>}, {pipeline_mode = #tpu.pipeline_mode<synchronous>, transform_indices = @transform_4, window_bounds = array<i64: 1, 128>}, {transform_indices = @transform_5, window_bounds = array<i64: 2, 128>}]} {
    %c0 = arith.constant 0 : index
    %c0_0 = arith.constant 0 : index
    %0 = vector.load %arg1[%c0, %c0_0] : memref<2x32xf32, #tpu.memory_space<vmem>>, vector<2x32xf32>
    %1 = arith.truncf %0 : vector<2x32xf32> to vector<2x32xbf16>
    %c0_1 = arith.constant 0 : index
    %c0_2 = arith.constant 0 : index
    %2 = vector.load %arg2[%c0_1, %c0_2] : memref<32x32xbf16, #tpu.memory_space<vmem>>, vector<32x32xbf16>
    %cst = arith.constant dense<0.000000e+00> : vector<2x32xf32>
    %3 = tpu.matmul %1, %2, %cst {dimension_numbers = #tpu.dot_dimension_numbers<[1], [0], [0], [1], [0, 0, 1, 1], [], []>} : vector<2x32xbf16>, vector<32x32xbf16>, vector<2x32xf32> -> vector<2x32xf32>
    %c0_3 = arith.constant 0 : index
    %c0_4 = arith.constant 0 : index
    %4 = vector.load %arg3[%c0_3, %c0_4] : memref<1x32xf32, #tpu.memory_space<vmem>>, vector<1x32xf32>
    %5 = vector.broadcast %4 : vector<1x32xf32> to vector<2x32xf32>
    %6 = arith.addf %3, %5 : vector<2x32xf32>
    %7 = math.tanh %6 : vector<2x32xf32>
    %8 = arith.truncf %7 : vector<2x32xf32> to vector<2x32xbf16>
    %c0_5 = arith.constant 0 : index
    %c0_6 = arith.constant 0 : index
    %9 = vector.load %arg4[%c0_5, %c0_6] : memref<32x128xbf16, #tpu.memory_space<vmem>>, vector<32x128xbf16>
    %cst_7 = arith.constant dense<0.000000e+00> : vector<2x128xf32>
    %10 = tpu.matmul %8, %9, %cst_7 {dimension_numbers = #tpu.dot_dimension_numbers<[1], [0], [0], [1], [0, 0, 1, 1], [], []>} : vector<2x32xbf16>, vector<32x128xbf16>, vector<2x128xf32> -> vector<2x128xf32>
    %c0_8 = arith.constant 0 : index
    %c0_9 = arith.constant 0 : index
    %11 = vector.load %arg5[%c0_8, %c0_9] : memref<1x128xf32, #tpu.memory_space<vmem>>, vector<1x128xf32>
    %12 = vector.broadcast %11 : vector<1x128xf32> to vector<2x128xf32>
    %13 = arith.addf %10, %12 : vector<2x128xf32>
    %c0_10 = arith.constant 0 : index
    %c0_11 = arith.constant 0 : index
    %14 = vector.load %arg6[%c0_10, %c0_11] : memref<2x128xf32, #tpu.memory_space<vmem>>, vector<2x128xf32>
    tpu.vector_store %arg6[%c0_10, %c0_11], %13 {strides = array<i32>} : memref<2x128xf32, #tpu.memory_space<vmem>>, vector<2x128xf32>,
    return
  }
  func.func @transform_0(%arg0: i32) -> (i32, i32) {
    %c0_i32 = arith.constant 0 : i32
    %c0_i32_0 = arith.constant 0 : i32
    return %arg0, %c0_i32 : i32, i32
  }
  func.func @transform_1(%arg0: i32) -> (i32, i32) {
    %c0_i32 = arith.constant 0 : i32
    %c0_i32_0 = arith.constant 0 : i32
    %c0_i32_1 = arith.constant 0 : i32
    return %c0_i32, %c0_i32_0 : i32, i32
  }
  func.func @transform_2(%arg0: i32) -> (i32, i32) {
    %c0_i32 = arith.constant 0 : i32
    %c0_i32_0 = arith.constant 0 : i32
    %c0_i32_1 = arith.constant 0 : i32
    return %c0_i32, %c0_i32_0 : i32, i32
  }
  func.func @transform_3(%arg0: i32) -> (i32, i32) {
    %c0_i32 = arith.constant 0 : i32
    %c0_i32_0 = arith.constant 0 : i32
    %c0_i32_1 = arith.constant 0 : i32
    return %c0_i32, %c0_i32_0 : i32, i32
  }
  func.func @transform_4(%arg0: i32) -> (i32, i32) {
    %c0_i32 = arith.constant 0 : i32
    %c0_i32_0 = arith.constant 0 : i32
    %c0_i32_1 = arith.constant 0 : i32
    return %c0_i32, %c0_i32_0 : i32, i32
  }
  func.func @transform_5(%arg0: i32) -> (i32, i32) {
    %c0_i32 = arith.constant 0 : i32
    %c0_i32_0 = arith.constant 0 : i32
    return %arg0, %c0_i32 : i32, i32
  }
}

</mosaic_0001>

<llo_original>
// kernel: tpu_custom_call.1
$region0: #{tpu_custom_call.1}
  #allocation0 [shape = 'u32[]', space=smem, size = 0x4, offset = 0x4, fixed_abs, tag = 'smem constant byte address 0x4 - core index']
  #allocation1 [shape = 'u32[144,128]{1,0:T(1,128)}', space=vmem, size = 0x12000, scoped, tag = 'internal scratch']
  %s0 = inlined_call_operand.hbm [shape: f32[2,32], index: 0, kind: input, shape index: {}]
  %s1 = inlined_call_operand.hbm [shape: bf16[32,32], index: 1, kind: input, shape index: {}]
  %s2 = inlined_call_operand.vmem [shape: f32[1,32], index: 2, kind: input, shape index: {}]
  %s3 = inlined_call_operand.hbm [shape: bf16[32,128], index: 3, kind: input, shape index: {}]
  %s4 = inlined_call_operand.vmem [shape: f32[1,128], index: 4, kind: input, shape index: {}]
  %s5 = inlined_call_operand.hbm [shape: f32[2,128], index: 5, kind: output, shape index: {}]
  %s6 = sld [smem:[#allocation0]]
  $region42: #{tpu_custom_call.1} parent=0
    _
  %s8 = ssub.s32 1, %s6
  %s9 = scalar_select 0, %s8, %s6
  $region1: #{tpu_custom_call.1} parent=0
    #allocation2 [shape = 'u8[1024]{0}', space=vmem, size = 0x400, scoped, tag = 'input window, operand 0, single buffered']
    #allocation3 [shape = 's32[1]{0}', space=sflag, size = 0x4, scoped, tag = 'scoped memory for tpu_custom_call.1']
    #allocation4 [shape = 's32[1]{0}', space=sflag, size = 0x4, scoped, tag = 'scoped memory for tpu_custom_call.1']
    #allocation5 [shape = 'u8[8192]{0}', space=vmem, size = 0x2000, scoped, tag = 'input window, operand 1, single buffered']
    #allocation6 [shape = 's32[1]{0}', space=sflag, size = 0x4, scoped, tag = 'scoped memory for tpu_custom_call.1']
    #allocation7 [shape = 'u8[8192]{0}', space=vmem, size = 0x2000, scoped, tag = 'input window, operand 3, single buffered']
    #allocation8 [shape = 'u8[1024]{0}', space=vmem, size = 0x400, scoped, tag = 'output window, operand 0, single buffered']
    %10 = vsyncpa [#allocation3], 0
    %11 = vsyncpa [#allocation6], 0
    %12 = vsyncpa [#allocation4], 0
    // Predicated region
    $region2: #{tpu_custom_call.1} parent=1 // pred_check
      _
    $region3: #{tpu_custom_call.1} parent=1 // pred_check_branch
      %14 = sbr.rel (0) target = $region5
    $region4: #{tpu_custom_call.1} parent=1 // pred_region
      %s16 = ssub.s32 32, 32
      %17 = vsyncadd [#allocation3], %s16
      %s19 = sshll.u32 [#allocation2], 4
      %s20 = int_to_ptr.vmem [resolvable:$true] %s19
      %22 = dma.hbm_to_vmem [thread:$0]  %s0, 32, %s20, [#allocation3]
    $region5: #{tpu_custom_call.1} parent=1 // pred_fallthru
      _
    // Predicated region
    $region6: #{tpu_custom_call.1} parent=1 // pred_check
      _
    $region7: #{tpu_custom_call.1} parent=1 // pred_check_branch
      %24 = sbr.rel (0) target = $region9
    $region8: #{tpu_custom_call.1} parent=1 // pred_region
      %s26 = ssub.s32 256, 256
      %27 = vsyncadd [#allocation6], %s26
      %s28 = sshll.u32 [#allocation5], 4
      %s29 = int_to_ptr.vmem [resolvable:$true] %s28
      %34 = dma.hbm_to_vmem [thread:$0]  %s1, 256, %s29, [#allocation6], 64, 64, 4
    $region9: #{tpu_custom_call.1} parent=1 // pred_fallthru
      _
    // Predicated region
    $region10: #{tpu_custom_call.1} parent=1 // pred_check
      _
    $region11: #{tpu_custom_call.1} parent=1 // pred_check_branch
      %36 = sbr.rel (0) target = $region13
    $region12: #{tpu_custom_call.1} parent=1 // pred_region
      _
    $region13: #{tpu_custom_call.1} parent=1 // pred_fallthru
      _
    // Predicated region
    $region14: #{tpu_custom_call.1} parent=1 // pred_check
      _
    $region15: #{tpu_custom_call.1} parent=1 // pred_check_branch
      %38 = sbr.rel (0) target = $region17
    $region16: #{tpu_custom_call.1} parent=1 // pred_region
      %s40 = ssub.s32 256, 256
      %41 = vsyncadd [#allocation6], %s40
      %s42 = sshll.u32 [#allocation7], 4
      %s43 = int_to_ptr.vmem [resolvable:$true] %s42
      %48 = dma.hbm_to_vmem [thread:$0]  %s3, 256, %s43, [#allocation6], 64, 64, 4
    $region17: #{tpu_custom_call.1} parent=1 // pred_fallthru
      _
    // Predicated region
    $region18: #{tpu_custom_call.1} parent=1 // pred_check
      _
    $region19: #{tpu_custom_call.1} parent=1 // pred_check_branch
      %50 = sbr.rel (0) target = $region21
    $region20: #{tpu_custom_call.1} parent=1 // pred_region
      _
    $region21: #{tpu_custom_call.1} parent=1 // pred_fallthru
      _
    // Predicated region
    $region22: #{tpu_custom_call.1} parent=1 // pred_check
      _
    $region23: #{tpu_custom_call.1} parent=1 // pred_check_branch
      %52 = sbr.rel (0) target = $region25
    $region24: #{tpu_custom_call.1} parent=1 // pred_region
      %53 = dma.done [#allocation3], 32
    $region25: #{tpu_custom_call.1} parent=1 // pred_fallthru
      _
    // Predicated region
    $region26: #{tpu_custom_call.1} parent=1 // pred_check
      _
    $region27: #{tpu_custom_call.1} parent=1 // pred_check_branch
      %55 = sbr.rel (0) target = $region29
    $region28: #{tpu_custom_call.1} parent=1 // pred_region
      %56 = dma.done [#allocation6], 256
    $region29: #{tpu_custom_call.1} parent=1 // pred_fallthru
      _
    // Predicated region
    $region30: #{tpu_custom_call.1} parent=1 // pred_check
      _
    $region31: #{tpu_custom_call.1} parent=1 // pred_check_branch
      %58 = sbr.rel (0) target = $region33
    $region32: #{tpu_custom_call.1} parent=1 // pred_region
      %59 = dma.done [#allocation6], 256
    $region33: #{tpu_custom_call.1} parent=1 // pred_fallthru
      _
    %v61 = vld [vmem:[#allocation2] sm:$0x3]
    %v62 = vpack.c.bf16 %v61, %v61
    %v63 = vld [vmem:[#allocation5] sm:$0xf]
    %v64 = vld [vmem:[#allocation5 + $0x4] sm:$0xf]
    %v65 = vld [vmem:[#allocation5 + $0x8] sm:$0xf]
    %v66 = vld [vmem:[#allocation5 + $0xc] sm:$0xf]
    %v67 = vld [vmem:[%s2] sm:$0x1]
    %v69 = vlaneseq
    %v70 = vshrl.u32 %v69, 7
    %v71 = vsub.s32 0, %v70
    %v72 = vrot.slane %v67, %v71
    %v78 = vunpack.c.l.b16 %v63
    %v79 = vunpack.c.l.b16 %v64
    %v80 = vunpack.c.l.b16 %v65
    %v81 = vunpack.c.l.b16 %v66
    %v82 = vpack.c.b16 %v79, %v78
    %v83 = vpack.c.b16 %v81, %v80
    %vm86 = vcmask 261120
    %v88 = vsel %vm86, %v62, 0
    %90 = vmatprep.subr.bf16.mxu0 0
    %91 = vmatpush1.bf16.msra.mxu0 0
    %92 = vmatprep.subr.bf16.mxu0 0
    %93 = vmatpush1.bf16.msra.mxu0 0
    %94 = vmatprep.subr.bf16.mxu0 0
    %95 = vmatpush1.bf16.msra.mxu0 0
    %96 = vmatprep.subr.bf16.mxu0 0
    %97 = vmatpush1.bf16.msra.mxu0 0
    %98 = vmatprep.subr.bf16.mxu0 0
    %99 = vmatpush1.bf16.msra.mxu0 0
    %100 = vmatprep.subr.bf16.mxu0 0
    %101 = vmatpush1.bf16.msra.mxu0 0
    %102 = vmatprep.subr.bf16.mxu0 0
    %103 = vmatpush1.bf16.msra.mxu0 %v83
    %104 = vmatprep.subr.bf16.mxu0 0
    %105 = vmatpush1.bf16.msra.mxu0 %v82
    %106 = vmatprep.subr.bf16.mxu0 0
    %107 = vmatpush2.bf16.msra.mxu0 0
    %108 = vmatprep.subr.bf16.mxu0 0
    %109 = vmatpush2.bf16.msra.mxu0 0
    %110 = vmatprep.subr.bf16.mxu0 0
    %111 = vmatpush2.bf16.msra.mxu0 0
    %112 = vmatprep.subr.bf16.mxu0 0
    %113 = vmatpush2.bf16.msra.mxu0 0
    %114 = vmatprep.subr.bf16.mxu0 0
    %115 = vmatpush2.bf16.msra.mxu0 0
    %116 = vmatprep.subr.bf16.mxu0 0
    %117 = vmatpush2.bf16.msra.mxu0 0
    %118 = vmatprep.subr.bf16.mxu0 0
    %119 = vmatpush2.bf16.msra.mxu0 0
    %120 = vmatprep.subr.bf16.mxu0 0
    %121 = vmatpush2.bf16.msra.mxu0 0
    %122 = vmatprep.mubr.bf16.mxu0 0
    %123 = vmatmul.mubr.bf16.gmra.mxu0 %v88
    %v124 = vpop.f32.mrf.mxu0
    %v125 = vadd.f32 %v72, %v124
    %v126 = vpop.f32.mrf.mxu0
    %v127 = vpop.f32.mrf.mxu0
    %v128 = vpop.f32.mrf.mxu0
    %129 = vdwg.mxu0
    %v130 = vtanh.pop %v125
    %v131 = vpack.c.bf16 %v130, %v130
    %v132 = vld [vmem:[#allocation7] sm:$0xf]
    %v133 = vld [vmem:[#allocation7 + $0x4] sm:$0xf]
    %v134 = vld [vmem:[#allocation7 + $0x8] sm:$0xf]
    %v135 = vld [vmem:[#allocation7 + $0xc] sm:$0xf]
    %v136 = vld [vmem:[%s4] sm:$0x1]
    %v138 = vlaneseq
    %v139 = vshrl.u32 %v138, 7
    %v140 = vsub.s32 0, %v139
    %v141 = vrot.slane %v136, %v140
    %v147 = vunpack.c.l.b16 %v132
    %v148 = vunpack.c.l.b16 %v133
    %v149 = vunpack.c.l.b16 %v134
    %v150 = vunpack.c.l.b16 %v135
    %v151 = vpack.c.b16 %v148, %v147
    %v152 = vpack.c.b16 %v150, %v149
    %v156 = vsel %vm86, %v131, 0
    %158 = vmatprep.subr.bf16.mxu0 0
    %159 = vmatpush1.bf16.msra.mxu0 0
    %160 = vmatprep.subr.bf16.mxu0 0
    %161 = vmatpush1.bf16.msra.mxu0 0
    %162 = vmatprep.subr.bf16.mxu0 0
    %163 = vmatpush1.bf16.msra.mxu0 0
    %164 = vmatprep.subr.bf16.mxu0 0
    %165 = vmatpush1.bf16.msra.mxu0 0
    %166 = vmatprep.subr.bf16.mxu0 0
    %167 = vmatpush1.bf16.msra.mxu0 0
    %168 = vmatprep.subr.bf16.mxu0 0
    %169 = vmatpush1.bf16.msra.mxu0 0
    %170 = vmatprep.subr.bf16.mxu0 0
    %171 = vmatpush1.bf16.msra.mxu0 %v152
    %172 = vmatprep.subr.bf16.mxu0 0
    %173 = vmatpush1.bf16.msra.mxu0 %v151
    %174 = vmatprep.subr.bf16.mxu0 0
    %175 = vmatpush2.bf16.msra.mxu0 0
    %176 = vmatprep.subr.bf16.mxu0 0
    %177 = vmatpush2.bf16.msra.mxu0 0
    %178 = vmatprep.subr.bf16.mxu0 0
    %179 = vmatpush2.bf16.msra.mxu0 0
    %180 = vmatprep.subr.bf16.mxu0 0
    %181 = vmatpush2.bf16.msra.mxu0 0
    %182 = vmatprep.subr.bf16.mxu0 0
    %183 = vmatpush2.bf16.msra.mxu0 0
    %184 = vmatprep.subr.bf16.mxu0 0
    %185 = vmatpush2.bf16.msra.mxu0 0
    %186 = vmatprep.subr.bf16.mxu0 0
    %187 = vmatpush2.bf16.msra.mxu0 0
    %188 = vmatprep.subr.bf16.mxu0 0
    %189 = vmatpush2.bf16.msra.mxu0 0
    %190 = vmatprep.mubr.bf16.mxu0 0
    %191 = vmatmul.mubr.bf16.gmra.mxu0 %v156
    %v192 = vpop.f32.mrf.mxu0
    %v193 = vadd.f32 %v141, %v192
    %v194 = vpop.f32.mrf.mxu0
    %v195 = vpop.f32.mrf.mxu0
    %v196 = vpop.f32.mrf.mxu0
    %197 = vdwg.mxu0
    %198 = vst [vmem:[#allocation8] sm:$0x3] %v193
    // Predicated region
    $region34: #{tpu_custom_call.1} parent=1 // pred_check
      _
    $region35: #{tpu_custom_call.1} parent=1 // pred_check_branch
      %200 = sbr.rel (0) target = $region37
    $region36: #{tpu_custom_call.1} parent=1 // pred_region
      %s202 = ssub.s32 32, 32
      %203 = vsyncadd [#allocation4], %s202
      %s205 = sshll.u32 [#allocation8], 4
      %s206 = int_to_ptr.vmem [resolvable:$true] %s205
      %208 = dma.vmem_to_hbm [thread:$0]  %s206, 32, %s5, [#allocation4]
    $region37: #{tpu_custom_call.1} parent=1 // pred_fallthru
      _
    // Predicated region
    $region38: #{tpu_custom_call.1} parent=1 // pred_check
      _
    $region39: #{tpu_custom_call.1} parent=1 // pred_check_branch
      %210 = sbr.rel (0) target = $region41
    $region40: #{tpu_custom_call.1} parent=1 // pred_region
      %211 = dma.done [#allocation4], 32
    $region41: #{tpu_custom_call.1} parent=1 // pred_fallthru
      _
    %212 = vsyncpa [#allocation3], 1
    %213 = vsyncpa [#allocation6], 1
    %214 = vsyncpa [#allocation4], 1

// kernel: tpu_custom_call.1
$region0: #{tpu_custom_call.1}
  #allocation0 [shape = 'u32[]', space=smem, size = 0x4, offset = 0x4, fixed_abs, tag = 'smem constant byte address 0x4 - core index']
  #allocation1 [shape = 'u32[144,128]{1,0:T(1,128)}', space=vmem, size = 0x12000, scoped, tag = 'internal scratch']
  %s0 = inlined_call_operand.hbm [shape: f32[2,32], index: 0, kind: input, shape index: {}]
  %s1 = inlined_call_operand.hbm [shape: bf16[32,32], index: 1, kind: input, shape index: {}]
  %s2 = inlined_call_operand.vmem [shape: f32[1,32], index: 2, kind: input, shape index: {}]
  %s3 = inlined_call_operand.hbm [shape: bf16[32,128], index: 3, kind: input, shape index: {}]
  %s4 = inlined_call_operand.vmem [shape: f32[1,128], index: 4, kind: input, shape index: {}]
  %s5 = inlined_call_operand.hbm [shape: f32[2,128], index: 5, kind: output, shape index: {}]
  %s6 = sld [smem:[#allocation0]]
  $region42: #{tpu_custom_call.1} parent=0
    _
  %s8 = ssub.s32 1, %s6
  %s9 = scalar_select 0, %s8, %s6
  $region1: #{tpu_custom_call.1} parent=0
    #allocation2 [shape = 'u8[1024]{0}', space=vmem, size = 0x400, scoped, tag = 'input window, operand 0, single buffered']
    #allocation3 [shape = 's32[1]{0}', space=sflag, size = 0x4, scoped, tag = 'scoped memory for tpu_custom_call.1']
    #allocation4 [shape = 's32[1]{0}', space=sflag, size = 0x4, scoped, tag = 'scoped memory for tpu_custom_call.1']
    #allocation5 [shape = 'u8[8192]{0}', space=vmem, size = 0x2000, scoped, tag = 'input window, operand 1, single buffered']
    #allocation6 [shape = 's32[1]{0}', space=sflag, size = 0x4, scoped, tag = 'scoped memory for tpu_custom_call.1']
    #allocation7 [shape = 'u8[8192]{0}', space=vmem, size = 0x2000, scoped, tag = 'input window, operand 3, single buffered']
    #allocation8 [shape = 'u8[1024]{0}', space=vmem, size = 0x400, scoped, tag = 'output window, operand 0, single buffered']
    %10 = vsyncpa [#allocation3], 0
    %11 = vsyncpa [#allocation6], 0
    %12 = vsyncpa [#allocation4], 0
    // Predicated region
    $region2: #{tpu_custom_call.1} parent=1 // pred_check
      _
    $region3: #{tpu_custom_call.1} parent=1 // pred_check_branch
      %14 = sbr.rel (0) target = $region5
    $region4: #{tpu_custom_call.1} parent=1 // pred_region
      %s16 = ssub.s32 32, 32
      %17 = vsyncadd [#allocation3], %s16
      %s19 = sshll.u32 [#allocation2], 4
      %s20 = int_to_ptr.vmem [resolvable:$true] %s19
      %22 = dma.hbm_to_vmem [thread:$0]  %s0, 32, %s20, [#allocation3]
    $region5: #{tpu_custom_call.1} parent=1 // pred_fallthru
      _
    // Predicated region
    $region6: #{tpu_custom_call.1} parent=1 // pred_check
      _
    $region7: #{tpu_custom_call.1} parent=1 // pred_check_branch
      %24 = sbr.rel (0) target = $region9
    $region8: #{tpu_custom_call.1} parent=1 // pred_region
      %s26 = ssub.s32 256, 256
      %27 = vsyncadd [#allocation6], %s26
      %s28 = sshll.u32 [#allocation5], 4
      %s29 = int_to_ptr.vmem [resolvable:$true] %s28
      %34 = dma.hbm_to_vmem [thread:$0]  %s1, 256, %s29, [#allocation6], 64, 64, 4
    $region9: #{tpu_custom_call.1} parent=1 // pred_fallthru
      _
    // Predicated region
    $region10: #{tpu_custom_call.1} parent=1 // pred_check
      _
    $region11: #{tpu_custom_call.1} parent=1 // pred_check_branch
      %36 = sbr.rel (0) target = $region13
    $region12: #{tpu_custom_call.1} parent=1 // pred_region
      _
    $region13: #{tpu_custom_call.1} parent=1 // pred_fallthru
      _
    // Predicated region
    $region14: #{tpu_custom_call.1} parent=1 // pred_check
      _
    $region15: #{tpu_custom_call.1} parent=1 // pred_check_branch
      %38 = sbr.rel (0) target = $region17
    $region16: #{tpu_custom_call.1} parent=1 // pred_region
      %s40 = ssub.s32 256, 256
      %41 = vsyncadd [#allocation6], %s40
      %s42 = sshll.u32 [#allocation7], 4
      %s43 = int_to_ptr.vmem [resolvable:$true] %s42
      %48 = dma.hbm_to_vmem [thread:$0]  %s3, 256, %s43, [#allocation6], 64, 64, 4
    $region17: #{tpu_custom_call.1} parent=1 // pred_fallthru
      _
    // Predicated region
    $region18: #{tpu_custom_call.1} parent=1 // pred_check
      _
    $region19: #{tpu_custom_call.1} parent=1 // pred_check_branch
      %50 = sbr.rel (0) target = $region21
    $region20: #{tpu_custom_call.1} parent=1 // pred_region
      _
    $region21: #{tpu_custom_call.1} parent=1 // pred_fallthru
      _
    // Predicated region
    $region22: #{tpu_custom_call.1} parent=1 // pred_check
      _
    $region23: #{tpu_custom_call.1} parent=1 // pred_check_branch
      %52 = sbr.rel (0) target = $region25
    $region24: #{tpu_custom_call.1} parent=1 // pred_region
      %53 = dma.done [#allocation3], 32
    $region25: #{tpu_custom_call.1} parent=1 // pred_fallthru
      _
    // Predicated region
    $region26: #{tpu_custom_call.1} parent=1 // pred_check
      _
    $region27: #{tpu_custom_call.1} parent=1 // pred_check_branch
      %55 = sbr.rel (0) target = $region29
    $region28: #{tpu_custom_call.1} parent=1 // pred_region
      %56 = dma.done [#allocation6], 256
    $region29: #{tpu_custom_call.1} parent=1 // pred_fallthru
      _
    // Predicated region
    $region30: #{tpu_custom_call.1} parent=1 // pred_check
      _
    $region31: #{tpu_custom_call.1} parent=1 // pred_check_branch
      %58 = sbr.rel (0) target = $region33
    $region32: #{tpu_custom_call.1} parent=1 // pred_region
      %59 = dma.done [#allocation6], 256
    $region33: #{tpu_custom_call.1} parent=1 // pred_fallthru
      _
    %v61 = vld [vmem:[#allocation2] sm:$0x3]
    %v62 = vpack.c.bf16 %v61, %v61
    %v63 = vld [vmem:[#allocation5] sm:$0xf]
    %v64 = vld [vmem:[#allocation5 + $0x4] sm:$0xf]
    %v65 = vld [vmem:[#allocation5 + $0x8] sm:$0xf]
    %v66 = vld [vmem:[#allocation5 + $0xc] sm:$0xf]
    %v67 = vld [vmem:[%s2] sm:$0x1]
    %v69 = vlaneseq
    %v70 = vshrl.u32 %v69, 7
    %v71 = vsub.s32 0, %v70
    %v72 = vrot.slane %v67, %v71
    %v78 = vunpack.c.l.b16 %v63
    %v79 = vunpack.c.l.b16 %v64
    %v80 = vunpack.c.l.b16 %v65
    %v81 = vunpack.c.l.b16 %v66
    %v82 = vpack.c.b16 %v79, %v78
    %v83 = vpack.c.b16 %v81, %v80
    %vm86 = vcmask 261120
    %v88 = vsel %vm86, %v62, 0
    %90 = vmatprep.subr.bf16.mxu0 0
    %91 = vmatpush1.bf16.msra.mxu0 0
    %92 = vmatprep.subr.bf16.mxu0 0
    %93 = vmatpush1.bf16.msra.mxu0 0
    %94 = vmatprep.subr.bf16.mxu0 0
    %95 = vmatpush1.bf16.msra.mxu0 0
    %96 = vmatprep.subr.bf16.mxu0 0
    %97 = vmatpush1.bf16.msra.mxu0 0
    %98 = vmatprep.subr.bf16.mxu0 0
    %99 = vmatpush1.bf16.msra.mxu0 0
    %100 = vmatprep.subr.bf16.mxu0 0
    %101 = vmatpush1.bf16.msra.mxu0 0
    %102 = vmatprep.subr.bf16.mxu0 0
    %103 = vmatpush1.bf16.msra.mxu0 %v83
    %104 = vmatprep.subr.bf16.mxu0 0
    %105 = vmatpush1.bf16.msra.mxu0 %v82
    %106 = vmatprep.subr.bf16.mxu0 0
    %107 = vmatpush2.bf16.msra.mxu0 0
    %108 = vmatprep.subr.bf16.mxu0 0
    %109 = vmatpush2.bf16.msra.mxu0 0
    %110 = vmatprep.subr.bf16.mxu0 0
    %111 = vmatpush2.bf16.msra.mxu0 0
    %112 = vmatprep.subr.bf16.mxu0 0
    %113 = vmatpush2.bf16.msra.mxu0 0
    %114 = vmatprep.subr.bf16.mxu0 0
    %115 = vmatpush2.bf16.msra.mxu0 0
    %116 = vmatprep.subr.bf16.mxu0 0
    %117 = vmatpush2.bf16.msra.mxu0 0
    %118 = vmatprep.subr.bf16.mxu0 0
    %119 = vmatpush2.bf16.msra.mxu0 0
    %120 = vmatprep.subr.bf16.mxu0 0
    %121 = vmatpush2.bf16.msra.mxu0 0
    %122 = vmatprep.mubr.bf16.mxu0 0
    %123 = vmatmul.mubr.bf16.gmra.mxu0 %v88
    %v124 = vpop.f32.mrf.mxu0
    %v125 = vadd.f32 %v72, %v124
    %v126 = vpop.f32.mrf.mxu0
    %v127 = vpop.f32.mrf.mxu0
    %v128 = vpop.f32.mrf.mxu0
    %129 = vdwg.mxu0
    %v130 = vtanh.pop %v125
    %v131 = vpack.c.bf16 %v130, %v130
    %v132 = vld [vmem:[#allocation7] sm:$0xf]
    %v133 = vld [vmem:[#allocation7 + $0x4] sm:$0xf]
    %v134 = vld [vmem:[#allocation7 + $0x8] sm:$0xf]
    %v135 = vld [vmem:[#allocation7 + $0xc] sm:$0xf]
    %v136 = vld [vmem:[%s4] sm:$0x1]
    %v138 = vlaneseq
    %v139 = vshrl.u32 %v138, 7
    %v140 = vsub.s32 0, %v139
    %v141 = vrot.slane %v136, %v140
    %v147 = vunpack.c.l.b16 %v132
    %v148 = vunpack.c.l.b16 %v133
    %v149 = vunpack.c.l.b16 %v134
    %v150 = vunpack.c.l.b16 %v135
    %v151 = vpack.c.b16 %v148, %v147
    %v152 = vpack.c.b16 %v150, %v149
    %v156 = vsel %vm86, %v131, 0
    %158 = vmatprep.subr.bf16.mxu0 0
    %159 = vmatpush1.bf16.msra.mxu0 0
    %160 = vmatprep.subr.bf16.mxu0 0
    %161 = vmatpush1.bf16.msra.mxu0 0
    %162 = vmatprep.subr.bf16.mxu0 0
    %163 = vmatpush1.bf16.msra.mxu0 0
    %164 = vmatprep.subr.bf16.mxu0 0
    %165 = vmatpush1.bf16.msra.mxu0 0
    %166 = vmatprep.subr.bf16.mxu0 0
    %167 = vmatpush1.bf16.msra.mxu0 0
    %168 = vmatprep.subr.bf16.mxu0 0
    %169 = vmatpush1.bf16.msra.mxu0 0
    %170 = vmatprep.subr.bf16.mxu0 0
    %171 = vmatpush1.bf16.msra.mxu0 %v152
    %172 = vmatprep.subr.bf16.mxu0 0
    %173 = vmatpush1.bf16.msra.mxu0 %v151
    %174 = vmatprep.subr.bf16.mxu0 0
    %175 = vmatpush2.bf16.msra.mxu0 0
    %176 = vmatprep.subr.bf16.mxu0 0
    %177 = vmatpush2.bf16.msra.mxu0 0
    %178 = vmatprep.subr.bf16.mxu0 0
    %179 = vmatpush2.bf16.msra.mxu0 0
    %180 = vmatprep.subr.bf16.mxu0 0
    %181 = vmatpush2.bf16.msra.mxu0 0
    %182 = vmatprep.subr.bf16.mxu0 0
    %183 = vmatpush2.bf16.msra.mxu0 0
    %184 = vmatprep.subr.bf16.mxu0 0
    %185 = vmatpush2.bf16.msra.mxu0 0
    %186 = vmatprep.subr.bf16.mxu0 0
    %187 = vmatpush2.bf16.msra.mxu0 0
    %188 = vmatprep.subr.bf16.mxu0 0
    %189 = vmatpush2.bf16.msra.mxu0 0
    %190 = vmatprep.mubr.bf16.mxu0 0
    %191 = vmatmul.mubr.bf16.gmra.mxu0 %v156
    %v192 = vpop.f32.mrf.mxu0
    %v193 = vadd.f32 %v141, %v192
    %v194 = vpop.f32.mrf.mxu0
    %v195 = vpop.f32.mrf.mxu0
    %v196 = vpop.f32.mrf.mxu0
    %197 = vdwg.mxu0
    %198 = vst [vmem:[#allocation8] sm:$0x3] %v193
    // Predicated region
    $region34: #{tpu_custom_call.1} parent=1 // pred_check
      _
    $region35: #{tpu_custom_call.1} parent=1 // pred_check_branch
      %200 = sbr.rel (0) target = $region37
    $region36: #{tpu_custom_call.1} parent=1 // pred_region
      %s202 = ssub.s32 32, 32
      %203 = vsyncadd [#allocation4], %s202
      %s205 = sshll.u32 [#allocation8], 4
      %s206 = int_to_ptr.vmem [resolvable:$true] %s205
      %208 = dma.vmem_to_hbm [thread:$0]  %s206, 32, %s5, [#allocation4]
    $region37: #{tpu_custom_call.1} parent=1 // pred_fallthru
      _
    // Predicated region
    $region38: #{tpu_custom_call.1} parent=1 // pred_check
      _
    $region39: #{tpu_custom_call.1} parent=1 // pred_check_branch
      %210 = sbr.rel (0) target = $region41
    $region40: #{tpu_custom_call.1} parent=1 // pred_region
      %211 = dma.done [#allocation4], 32
    $region41: #{tpu_custom_call.1} parent=1 // pred_fallthru
      _
    %212 = vsyncpa [#allocation3], 1
    %213 = vsyncpa [#allocation6], 1
    %214 = vsyncpa [#allocation4], 1

</llo_original>
